<compile_context>
chip_gen: v6e
topology: v6e:2x2x1
jax: 0.10.0
libtpu: 0.0.40
codegen_flags: <defaults>
</compile_context>

<pallas_src>
import functools

import jax
import jax.numpy as jnp
from jax.experimental import pallas as pl
from jax.experimental.pallas import tpu as pltpu


def _fcn_kernel(*refs, num_layers: int):
    # refs = (x_ref, w0_ref, b0_ref, w1_ref, b1_ref, ..., o_ref)
    x_ref = refs[0]
    o_ref = refs[-1]
    p = refs[1:-1]

    h = x_ref[...]
    # Statically unrolled layer chain: activations stay in vregs; tanh (EUP)
    # overlaps with the next layer's matmul (MXU).
    for i in range(num_layers):
        w = p[2 * i][...]
        b = p[2 * i + 1][...]
        h = jnp.dot(h, w, preferred_element_type=jnp.float32) + b
        if i < num_layers - 1:  # no activation after the final Linear
            h = jnp.tanh(h)
    o_ref[...] = h.astype(o_ref.dtype)


def fcn_forward(x, params, *, tile_b: int = 256):
    """Fused FCN forward: one pallas_call for the whole network."""
    batch, in_f = x.shape
    num_layers = len(params)
    out_f = params[-1][0].shape[1]

    # Lane-dense final store: pad last layer output width up to a multiple of 128.
    out_pad = ((out_f + 127) // 128) * 128

    # Batch tiling: one full-batch block when small; 256-row tiles when large.
    if batch <= tile_b:
        tb = batch
        padded_batch = batch
        xp = x
    else:
        tb = tile_b  # multiple of 8
        padded_batch = ((batch + tb - 1) // tb) * tb
        xp = jnp.pad(x, ((0, padded_batch - batch), (0, 0)))
    grid = (padded_batch // tb,)

    flat_inputs = [xp]
    in_specs = [pl.BlockSpec((tb, in_f), lambda i: (i, 0))]

    for li, (w, b) in enumerate(params):
        fi, fo = w.shape
        if li == num_layers - 1 and fo != out_pad:
            w = jnp.pad(w, ((0, 0), (0, out_pad - fo)))
            b = jnp.pad(b, ((0, out_pad - fo),))
            fo = out_pad
        flat_inputs.append(w)
        flat_inputs.append(b.reshape(1, fo))
        # Weights/biases: same full-array block every grid step (VMEM resident).
        in_specs.append(pl.BlockSpec((fi, fo), lambda i: (0, 0)))
        in_specs.append(pl.BlockSpec((1, fo), lambda i: (0, 0)))

    kernel = functools.partial(_fcn_kernel, num_layers=num_layers)
    out = pl.pallas_call(
        kernel,
        out_shape=jax.ShapeDtypeStruct((padded_batch, out_pad), jnp.float32),
        grid=grid,
        in_specs=in_specs,
        out_specs=pl.BlockSpec((tb, out_pad), lambda i: (i, 0)),
        compiler_params=pltpu.CompilerParams(
            dimension_semantics=("parallel",)),  # shards batch grid on v7x megacore
    )(*flat_inputs)

    return out[:batch, :out_f]


def init_fcn_params(key, input_neurons, output_neurons, hidden_neurons,
                    hidden_layers):
    """Deterministic init mimicking nn.Linear's U(-1/sqrt(fan_in), +...)."""
    dims = ([input_neurons] + [hidden_neurons] * (hidden_layers + 1)
            + [output_neurons])
    params = []
    for i in range(len(dims) - 1):
        fan_in, fan_out = dims[i], dims[i + 1]
        key, kw, kb = jax.random.split(key, 3)
        bound = 1.0 / jnp.sqrt(jnp.float32(fan_in))
        w = jax.random.uniform(kw, (fan_in, fan_out), jnp.float32,
                               minval=-bound, maxval=bound)
        b = jax.random.uniform(kb, (fan_out,), jnp.float32,
                               minval=-bound, maxval=bound)
        params.append((w, b))
    return params


if __name__ == "__main__":
    # Small shapes consistent with the module's forward.
    batch = 8
    input_neurons = 16
    hidden_neurons = 32
    output_neurons = 4
    hidden_layers = 2

    key = jax.random.PRNGKey(0)
    key, kx = jax.random.split(key)
    x = jax.random.normal(kx, (batch, input_neurons), jnp.float32)

    params = init_fcn_params(key, input_neurons, output_neurons,
                             hidden_neurons, hidden_layers)

    out = fcn_forward(x, params)
    out = jax.block_until_ready(out)

    # Pure-JAX reference check (same math, no Pallas).
    ref = x
    for i, (w, b) in enumerate(params):
        ref = ref @ w + b
        if i < len(params) - 1:
            ref = jnp.tanh(ref)
    assert out.shape == (batch, output_neurons)
    assert jnp.allclose(out, ref, atol=1e-5, rtol=1e-5)

    print("KERNEL_OK")
</pallas_src>

<mosaic_0001>
module attributes {stable_mosaic.version = 11 : i64} {
  func.func @_fcn_kernel(%arg0: i32, %arg1: memref<8x16xf32, #tpu.memory_space<vmem>>, %arg2: memref<16x32xf32, #tpu.memory_space<vmem>>, %arg3: memref<1x32xf32, #tpu.memory_space<vmem>>, %arg4: memref<32x32xf32, #tpu.memory_space<vmem>>, %arg5: memref<1x32xf32, #tpu.memory_space<vmem>>, %arg6: memref<32x32xf32, #tpu.memory_space<vmem>>, %arg7: memref<1x32xf32, #tpu.memory_space<vmem>>, %arg8: memref<32x128xf32, #tpu.memory_space<vmem>>, %arg9: memref<1x128xf32, #tpu.memory_space<vmem>>, %arg10: memref<8x128xf32, #tpu.memory_space<vmem>>) attributes {dimension_semantics = [#tpu.dimension_semantics<parallel>], iteration_bounds = array<i64: 1>, scalar_prefetch = 0 : i64, scratch_operands = 0 : i64, tpu.core_type = #tpu.core_type<tc>, window_params = [{transform_indices = @transform_0, window_bounds = array<i64: 8, 16>}, {pipeline_mode = #tpu.pipeline_mode<synchronous>, transform_indices = @transform_1, window_bounds = array<i64: 16, 32>}, {pipeline_mode = #tpu.pipeline_mode<synchronous>, transform_indices = @transform_2, window_bounds = array<i64: 1, 32>}, {pipeline_mode = #tpu.pipeline_mode<synchronous>, transform_indices = @transform_3, window_bounds = array<i64: 32, 32>}, {pipeline_mode = #tpu.pipeline_mode<synchronous>, transform_indices = @transform_4, window_bounds = array<i64: 1, 32>}, {pipeline_mode = #tpu.pipeline_mode<synchronous>, transform_indices = @transform_5, window_bounds = array<i64: 32, 32>}, {pipeline_mode = #tpu.pipeline_mode<synchronous>, transform_indices = @transform_6, window_bounds = array<i64: 1, 32>}, {pipeline_mode = #tpu.pipeline_mode<synchronous>, transform_indices = @transform_7, window_bounds = array<i64: 32, 128>}, {pipeline_mode = #tpu.pipeline_mode<synchronous>, transform_indices = @transform_8, window_bounds = array<i64: 1, 128>}, {transform_indices = @transform_9, window_bounds = array<i64: 8, 128>}]} {
    %c0 = arith.constant 0 : index
    %c0_0 = arith.constant 0 : index
    %0 = vector.load %arg1[%c0, %c0_0] : memref<8x16xf32, #tpu.memory_space<vmem>>, vector<8x16xf32>
    %c0_1 = arith.constant 0 : index
    %c0_2 = arith.constant 0 : index
    %1 = vector.load %arg2[%c0_1, %c0_2] : memref<16x32xf32, #tpu.memory_space<vmem>>, vector<16x32xf32>
    %c0_3 = arith.constant 0 : index
    %c0_4 = arith.constant 0 : index
    %2 = vector.load %arg3[%c0_3, %c0_4] : memref<1x32xf32, #tpu.memory_space<vmem>>, vector<1x32xf32>
    %cst = arith.constant dense<0.000000e+00> : vector<8x32xf32>
    %3 = tpu.matmul %0, %1, %cst {dimension_numbers = #tpu.dot_dimension_numbers<[1], [0], [0], [1], [0, 0, 1, 1], [], []>} : vector<8x16xf32>, vector<16x32xf32>, vector<8x32xf32> -> vector<8x32xf32>
    %4 = vector.broadcast %2 : vector<1x32xf32> to vector<8x32xf32>
    %5 = arith.addf %3, %4 : vector<8x32xf32>
    %6 = math.tanh %5 : vector<8x32xf32>
    %c0_5 = arith.constant 0 : index
    %c0_6 = arith.constant 0 : index
    %7 = vector.load %arg4[%c0_5, %c0_6] : memref<32x32xf32, #tpu.memory_space<vmem>>, vector<32x32xf32>
    %c0_7 = arith.constant 0 : index
    %c0_8 = arith.constant 0 : index
    %8 = vector.load %arg5[%c0_7, %c0_8] : memref<1x32xf32, #tpu.memory_space<vmem>>, vector<1x32xf32>
    %cst_9 = arith.constant dense<0.000000e+00> : vector<8x32xf32>
    %9 = tpu.matmul %6, %7, %cst_9 {dimension_numbers = #tpu.dot_dimension_numbers<[1], [0], [0], [1], [0, 0, 1, 1], [], []>} : vector<8x32xf32>, vector<32x32xf32>, vector<8x32xf32> -> vector<8x32xf32>
    %10 = vector.broadcast %8 : vector<1x32xf32> to vector<8x32xf32>
    %11 = arith.addf %9, %10 : vector<8x32xf32>
    %12 = math.tanh %11 : vector<8x32xf32>
    %c0_10 = arith.constant 0 : index
    %c0_11 = arith.constant 0 : index
    %13 = vector.load %arg6[%c0_10, %c0_11] : memref<32x32xf32, #tpu.memory_space<vmem>>, vector<32x32xf32>
    %c0_12 = arith.constant 0 : index
    %c0_13 = arith.constant 0 : index
    %14 = vector.load %arg7[%c0_12, %c0_13] : memref<1x32xf32, #tpu.memory_space<vmem>>, vector<1x32xf32>
    %cst_14 = arith.constant dense<0.000000e+00> : vector<8x32xf32>
    %15 = tpu.matmul %12, %13, %cst_14 {dimension_numbers = #tpu.dot_dimension_numbers<[1], [0], [0], [1], [0, 0, 1, 1], [], []>} : vector<8x32xf32>, vector<32x32xf32>, vector<8x32xf32> -> vector<8x32xf32>
    %16 = vector.broadcast %14 : vector<1x32xf32> to vector<8x32xf32>
    %17 = arith.addf %15, %16 : vector<8x32xf32>
    %18 = math.tanh %17 : vector<8x32xf32>
    %c0_15 = arith.constant 0 : index
    %c0_16 = arith.constant 0 : index
    %19 = vector.load %arg8[%c0_15, %c0_16] : memref<32x128xf32, #tpu.memory_space<vmem>>, vector<32x128xf32>
    %c0_17 = arith.constant 0 : index
    %c0_18 = arith.constant 0 : index
    %20 = vector.load %arg9[%c0_17, %c0_18] : memref<1x128xf32, #tpu.memory_space<vmem>>, vector<1x128xf32>
    %cst_19 = arith.constant dense<0.000000e+00> : vector<8x128xf32>
    %21 = tpu.matmul %18, %19, %cst_19 {dimension_numbers = #tpu.dot_dimension_numbers<[1], [0], [0], [1], [0, 0, 1, 1], [], []>} : vector<8x32xf32>, vector<32x128xf32>, vector<8x128xf32> -> vector<8x128xf32>
    %22 = vector.broadcast %20 : vector<1x128xf32> to vector<8x128xf32>
    %23 = arith.addf %21, %22 : vector<8x128xf32>
    %c0_20 = arith.constant 0 : index
    %c0_21 = arith.constant 0 : index
    %24 = vector.load %arg10[%c0_20, %c0_21] : memref<8x128xf32, #tpu.memory_space<vmem>>, vector<8x128xf32>
    tpu.vector_store %arg10[%c0_20, %c0_21], %23 {strides = array<i32>} : memref<8x128xf32, #tpu.memory_space<vmem>>, vector<8x128xf32>,
    return
  }
  func.func @transform_0(%arg0: i32) -> (i32, i32) {
    %c0_i32 = arith.constant 0 : i32
    %c0_i32_0 = arith.constant 0 : i32
    return %arg0, %c0_i32 : i32, i32
  }
  func.func @transform_1(%arg0: i32) -> (i32, i32) {
    %c0_i32 = arith.constant 0 : i32
    %c0_i32_0 = arith.constant 0 : i32
    %c0_i32_1 = arith.constant 0 : i32
    return %c0_i32, %c0_i32_0 : i32, i32
  }
  func.func @transform_2(%arg0: i32) -> (i32, i32) {
    %c0_i32 = arith.constant 0 : i32
    %c0_i32_0 = arith.constant 0 : i32
    %c0_i32_1 = arith.constant 0 : i32
    return %c0_i32, %c0_i32_0 : i32, i32
  }
  func.func @transform_3(%arg0: i32) -> (i32, i32) {
    %c0_i32 = arith.constant 0 : i32
    %c0_i32_0 = arith.constant 0 : i32
    %c0_i32_1 = arith.constant 0 : i32
    return %c0_i32, %c0_i32_0 : i32, i32
  }
  func.func @transform_4(%arg0: i32) -> (i32, i32) {
    %c0_i32 = arith.constant 0 : i32
    %c0_i32_0 = arith.constant 0 : i32
    %c0_i32_1 = arith.constant 0 : i32
    return %c0_i32, %c0_i32_0 : i32, i32
  }
  func.func @transform_5(%arg0: i32) -> (i32, i32) {
    %c0_i32 = arith.constant 0 : i32
    %c0_i32_0 = arith.constant 0 : i32
    %c0_i32_1 = arith.constant 0 : i32
    return %c0_i32, %c0_i32_0 : i32, i32
  }
  func.func @transform_6(%arg0: i32) -> (i32, i32) {
    %c0_i32 = arith.constant 0 : i32
    %c0_i32_0 = arith.constant 0 : i32
    %c0_i32_1 = arith.constant 0 : i32
    return %c0_i32, %c0_i32_0 : i32, i32
  }
  func.func @transform_7(%arg0: i32) -> (i32, i32) {
    %c0_i32 = arith.constant 0 : i32
    %c0_i32_0 = arith.constant 0 : i32
    %c0_i32_1 = arith.constant 0 : i32
    return %c0_i32, %c0_i32_0 : i32, i32
  }
  func.func @transform_8(%arg0: i32) -> (i32, i32) {
    %c0_i32 = arith.constant 0 : i32
    %c0_i32_0 = arith.constant 0 : i32
    %c0_i32_1 = arith.constant 0 : i32
    return %c0_i32, %c0_i32_0 : i32, i32
  }
  func.func @transform_9(%arg0: i32) -> (i32, i32) {
    %c0_i32 = arith.constant 0 : i32
    %c0_i32_0 = arith.constant 0 : i32
    return %arg0, %c0_i32 : i32, i32
  }
}

</mosaic_0001>

<llo_original>
// kernel: tpu_custom_call.1
$region0: #{tpu_custom_call.1}
  #allocation0 [shape = 'u32[]', space=smem, size = 0x4, offset = 0x4, fixed_abs, tag = 'smem constant byte address 0x4 - core index']
  #allocation1 [shape = 'u32[144,128]{1,0:T(1,128)}', space=vmem, size = 0x12000, scoped, tag = 'internal scratch']
  %s0 = inlined_call_operand.hbm [shape: f32[8,16], index: 0, kind: input, shape index: {}]
  %s1 = inlined_call_operand.hbm [shape: f32[16,32], index: 1, kind: input, shape index: {}]
  %s2 = inlined_call_operand.vmem [shape: f32[1,32], index: 2, kind: input, shape index: {}]
  %s3 = inlined_call_operand.hbm [shape: f32[32,32], index: 3, kind: input, shape index: {}]
  %s4 = inlined_call_operand.vmem [shape: f32[1,32], index: 4, kind: input, shape index: {}]
  %s5 = inlined_call_operand.hbm [shape: f32[32,32], index: 5, kind: input, shape index: {}]
  %s6 = inlined_call_operand.vmem [shape: f32[1,32], index: 6, kind: input, shape index: {}]
  %s7 = inlined_call_operand.hbm [shape: f32[32,128], index: 7, kind: input, shape index: {}]
  %s8 = inlined_call_operand.vmem [shape: f32[1,128], index: 8, kind: input, shape index: {}]
  %s9 = inlined_call_operand.hbm [shape: f32[8,128], index: 9, kind: output, shape index: {}]
  %s10 = sld [smem:[#allocation0]]
  $region66: #{tpu_custom_call.1} parent=0
    _
  %s12 = ssub.s32 1, %s10
  %s13 = scalar_select 0, %s12, %s10
  $region1: #{tpu_custom_call.1} parent=0
    #allocation2 [shape = 'u8[4096]{0}', space=vmem, size = 0x1000, scoped, tag = 'input window, operand 0, single buffered']
    #allocation3 [shape = 's32[1]{0}', space=sflag, size = 0x4, scoped, tag = 'scoped memory for tpu_custom_call.1']
    #allocation4 [shape = 's32[1]{0}', space=sflag, size = 0x4, scoped, tag = 'scoped memory for tpu_custom_call.1']
    #allocation5 [shape = 'u8[8192]{0}', space=vmem, size = 0x2000, scoped, tag = 'input window, operand 1, single buffered']
    #allocation6 [shape = 's32[1]{0}', space=sflag, size = 0x4, scoped, tag = 'scoped memory for tpu_custom_call.1']
    #allocation7 [shape = 'u8[16384]{0}', space=vmem, size = 0x4000, scoped, tag = 'input window, operand 3, single buffered']
    #allocation8 [shape = 'u8[16384]{0}', space=vmem, size = 0x4000, scoped, tag = 'input window, operand 5, single buffered']
    #allocation9 [shape = 's32[1]{0}', space=sflag, size = 0x4, scoped, tag = 'scoped memory for tpu_custom_call.1']
    #allocation10 [shape = 'u8[16384]{0}', space=vmem, size = 0x4000, scoped, tag = 'input window, operand 7, single buffered']
    #allocation11 [shape = 'u8[4096]{0}', space=vmem, size = 0x1000, scoped, tag = 'output window, operand 0, single buffered']
    %14 = vsyncpa [#allocation3], 0
    %15 = vsyncpa [#allocation6], 0
    %16 = vsyncpa [#allocation9], 0
    %17 = vsyncpa [#allocation4], 0
    // Predicated region
    $region2: #{tpu_custom_call.1} parent=1 // pred_check
      _
    $region3: #{tpu_custom_call.1} parent=1 // pred_check_branch
      %19 = sbr.rel (0) target = $region5
    $region4: #{tpu_custom_call.1} parent=1 // pred_region
      %s21 = ssub.s32 128, 128
      %22 = vsyncadd [#allocation3], %s21
      %s24 = sshll.u32 [#allocation2], 4
      %s25 = int_to_ptr.vmem [resolvable:$true] %s24
      %27 = dma.hbm_to_vmem [thread:$0]  %s0, 128, %s25, [#allocation3]
    $region5: #{tpu_custom_call.1} parent=1 // pred_fallthru
      _
    // Predicated region
    $region6: #{tpu_custom_call.1} parent=1 // pred_check
      _
    $region7: #{tpu_custom_call.1} parent=1 // pred_check_branch
      %29 = sbr.rel (0) target = $region9
    $region8: #{tpu_custom_call.1} parent=1 // pred_region
      %s31 = ssub.s32 256, 256
      %32 = vsyncadd [#allocation6], %s31
      %s33 = sshll.u32 [#allocation5], 4
      %s34 = int_to_ptr.vmem [resolvable:$true] %s33
      %39 = dma.hbm_to_vmem [thread:$0]  %s1, 256, %s34, [#allocation6], 128, 128, 8
    $region9: #{tpu_custom_call.1} parent=1 // pred_fallthru
      _
    // Predicated region
    $region10: #{tpu_custom_call.1} parent=1 // pred_check
      _
    $region11: #{tpu_custom_call.1} parent=1 // pred_check_branch
      %41 = sbr.rel (0) target = $region13
    $region12: #{tpu_custom_call.1} parent=1 // pred_region
      _
    $region13: #{tpu_custom_call.1} parent=1 // pred_fallthru
      _
    // Predicated region
    $region14: #{tpu_custom_call.1} parent=1 // pred_check
      _
    $region15: #{tpu_custom_call.1} parent=1 // pred_check_branch
      %43 = sbr.rel (0) target = $region17
    $region16: #{tpu_custom_call.1} parent=1 // pred_region
      %s45 = ssub.s32 512, 512
      %46 = vsyncadd [#allocation6], %s45
      %s47 = sshll.u32 [#allocation7], 4
      %s48 = int_to_ptr.vmem [resolvable:$true] %s47
      %53 = dma.hbm_to_vmem [thread:$0]  %s3, 512, %s48, [#allocation6], 128, 128, 8
    $region17: #{tpu_custom_call.1} parent=1 // pred_fallthru
      _
    // Predicated region
    $region18: #{tpu_custom_call.1} parent=1 // pred_check
      _
    $region19: #{tpu_custom_call.1} parent=1 // pred_check_branch
      %55 = sbr.rel (0) target = $region21
    $region20: #{tpu_custom_call.1} parent=1 // pred_region
      _
    $region21: #{tpu_custom_call.1} parent=1 // pred_fallthru
      _
    // Predicated region
    $region22: #{tpu_custom_call.1} parent=1 // pred_check
      _
    $region23: #{tpu_custom_call.1} parent=1 // pred_check_branch
      %57 = sbr.rel (0) target = $region25
    $region24: #{tpu_custom_call.1} parent=1 // pred_region
      %s59 = ssub.s32 512, 512
      %60 = vsyncadd [#allocation9], %s59
      %s61 = sshll.u32 [#allocation8], 4
      %s62 = int_to_ptr.vmem [resolvable:$true] %s61
      %67 = dma.hbm_to_vmem [thread:$0]  %s5, 512, %s62, [#allocation9], 128, 128, 8
    $region25: #{tpu_custom_call.1} parent=1 // pred_fallthru
      _
    // Predicated region
    $region26: #{tpu_custom_call.1} parent=1 // pred_check
      _
    $region27: #{tpu_custom_call.1} parent=1 // pred_check_branch
      %69 = sbr.rel (0) target = $region29
    $region28: #{tpu_custom_call.1} parent=1 // pred_region
      _
    $region29: #{tpu_custom_call.1} parent=1 // pred_fallthru
      _
    // Predicated region
    $region30: #{tpu_custom_call.1} parent=1 // pred_check
      _
    $region31: #{tpu_custom_call.1} parent=1 // pred_check_branch
      %71 = sbr.rel (0) target = $region33
    $region32: #{tpu_custom_call.1} parent=1 // pred_region
      %s73 = ssub.s32 512, 512
      %74 = vsyncadd [#allocation9], %s73
      %s75 = sshll.u32 [#allocation10], 4
      %s76 = int_to_ptr.vmem [resolvable:$true] %s75
      %81 = dma.hbm_to_vmem [thread:$0]  %s7, 512, %s76, [#allocation9], 128, 128, 8
    $region33: #{tpu_custom_call.1} parent=1 // pred_fallthru
      _
    // Predicated region
    $region34: #{tpu_custom_call.1} parent=1 // pred_check
      _
    $region35: #{tpu_custom_call.1} parent=1 // pred_check_branch
      %83 = sbr.rel (0) target = $region37
    $region36: #{tpu_custom_call.1} parent=1 // pred_region
      _
    $region37: #{tpu_custom_call.1} parent=1 // pred_fallthru
      _
    // Predicated region
    $region38: #{tpu_custom_call.1} parent=1 // pred_check
      _
    $region39: #{tpu_custom_call.1} parent=1 // pred_check_branch
      %85 = sbr.rel (0) target = $region41
    $region40: #{tpu_custom_call.1} parent=1 // pred_region
      %86 = dma.done [#allocation3], 128
    $region41: #{tpu_custom_call.1} parent=1 // pred_fallthru
      _
    // Predicated region
    $region42: #{tpu_custom_call.1} parent=1 // pred_check
      _
    $region43: #{tpu_custom_call.1} parent=1 // pred_check_branch
      %88 = sbr.rel (0) target = $region45
    $region44: #{tpu_custom_call.1} parent=1 // pred_region
      %89 = dma.done [#allocation6], 256
    $region45: #{tpu_custom_call.1} parent=1 // pred_fallthru
      _
    // Predicated region
    $region46: #{tpu_custom_call.1} parent=1 // pred_check
      _
    $region47: #{tpu_custom_call.1} parent=1 // pred_check_branch
      %91 = sbr.rel (0) target = $region49
    $region48: #{tpu_custom_call.1} parent=1 // pred_region
      %92 = dma.done [#allocation6], 512
    $region49: #{tpu_custom_call.1} parent=1 // pred_fallthru
      _
    // Predicated region
    $region50: #{tpu_custom_call.1} parent=1 // pred_check
      _
    $region51: #{tpu_custom_call.1} parent=1 // pred_check_branch
      %94 = sbr.rel (0) target = $region53
    $region52: #{tpu_custom_call.1} parent=1 // pred_region
      %95 = dma.done [#allocation9], 512
    $region53: #{tpu_custom_call.1} parent=1 // pred_fallthru
      _
    // Predicated region
    $region54: #{tpu_custom_call.1} parent=1 // pred_check
      _
    $region55: #{tpu_custom_call.1} parent=1 // pred_check_branch
      %97 = sbr.rel (0) target = $region57
    $region56: #{tpu_custom_call.1} parent=1 // pred_region
      %98 = dma.done [#allocation9], 512
    $region57: #{tpu_custom_call.1} parent=1 // pred_fallthru
      _
    %v99 = vld [vmem:[#allocation2] sm:$0xff]
    %v100 = vld [vmem:[#allocation5] sm:$0xff]
    %v101 = vld [vmem:[#allocation5 + $0x8] sm:$0xff]
    %v102 = vld [vmem:[%s2] sm:$0x1]
    %v104 = vlaneseq
    %v105 = vshrl.u32 %v104, 7
    %v106 = vsub.s32 0, %v105
    %v107 = vrot.slane %v102, %v106
    %vm109 = vcmask 130048
    %v111 = vsel %vm109, %v99, 0
    %113 = vmatprep.subr.mxu0 0.0
    %114 = vmatpush1.msra.mxu0 0.0
    %115 = vmatprep.subr.mxu0 0.0
    %116 = vmatpush1.msra.mxu0 0.0
    %117 = vmatprep.subr.mxu0 0.0
    %118 = vmatpush1.msra.mxu0 0.0
    %119 = vmatprep.subr.mxu0 0.0
    %120 = vmatpush1.msra.mxu0 0.0
    %121 = vmatprep.subr.mxu0 0.0
    %122 = vmatpush1.msra.mxu0 0.0
    %123 = vmatprep.subr.mxu0 0.0
    %124 = vmatpush1.msra.mxu0 0.0
    %125 = vmatprep.subr.mxu0 0.0
    %126 = vmatpush1.msra.mxu0 0.0
    %127 = vmatprep.subr.mxu0 0.0
    %128 = vmatpush1.msra.mxu0 0.0
    %129 = vmatprep.subr.mxu0 0.0
    %130 = vmatpush1.msra.mxu0 0.0
    %131 = vmatprep.subr.mxu0 0.0
    %132 = vmatpush1.msra.mxu0 0.0
    %133 = vmatprep.subr.mxu0 0.0
    %134 = vmatpush1.msra.mxu0 0.0
    %135 = vmatprep.subr.mxu0 0.0
    %136 = vmatpush1.msra.mxu0 0.0
    %137 = vmatprep.subr.mxu0 0.0
    %138 = vmatpush1.msra.mxu0 0.0
    %139 = vmatprep.subr.mxu0 0.0
    %140 = vmatpush1.msra.mxu0 0.0
    %141 = vmatprep.subr.mxu0 0.0
    %142 = vmatpush1.msra.mxu0 %v101
    %143 = vmatprep.subr.mxu0 0.0
    %144 = vmatpush1.msra.mxu0 %v100
    %145 = vmatprep.subr.mxu0 0.0
    %146 = vmatpush2.msra.mxu0 0.0
    %147 = vmatprep.subr.mxu0 0.0
    %148 = vmatpush2.msra.mxu0 0.0
    %149 = vmatprep.subr.mxu0 0.0
    %150 = vmatpush2.msra.mxu0 0.0
    %151 = vmatprep.subr.mxu0 0.0
    %152 = vmatpush2.msra.mxu0 0.0
    %153 = vmatprep.subr.mxu0 0.0
    %154 = vmatpush2.msra.mxu0 0.0
    %155 = vmatprep.subr.mxu0 0.0
    %156 = vmatpush2.msra.mxu0 0.0
    %157 = vmatprep.subr.mxu0 0.0
    %158 = vmatpush2.msra.mxu0 0.0
    %159 = vmatprep.subr.mxu0 0.0
    %160 = vmatpush2.msra.mxu0 0.0
    %161 = vmatprep.subr.mxu0 0.0
    %162 = vmatpush2.msra.mxu0 0.0
    %163 = vmatprep.subr.mxu0 0.0
    %164 = vmatpush2.msra.mxu0 0.0
    %165 = vmatprep.subr.mxu0 0.0
    %166 = vmatpush2.msra.mxu0 0.0
    %167 = vmatprep.subr.mxu0 0.0
    %168 = vmatpush2.msra.mxu0 0.0
    %169 = vmatprep.subr.mxu0 0.0
    %170 = vmatpush2.msra.mxu0 0.0
    %171 = vmatprep.subr.mxu0 0.0
    %172 = vmatpush2.msra.mxu0 0.0
    %173 = vmatprep.subr.mxu0 0.0
    %174 = vmatpush2.msra.mxu0 0.0
    %175 = vmatprep.subr.mxu0 0.0
    %176 = vmatpush2.msra.mxu0 0.0
    %177 = vmatprep.mubr.f32.mxu0 0.0
    %178 = vmatmul.mubr.f32.gmra.mxu0 %v111
    %v179 = vpop.f32.mrf.mxu0
    %v180 = vadd.f32 %v107, %v179
    %v181 = vpop.f32.mrf.mxu0
    %182 = vdwg.mxu0
    %v183 = vtanh.pop %v180
    %v184 = vld [vmem:[#allocation7] sm:$0xff]
    %v185 = vld [vmem:[#allocation7 + $0x8] sm:$0xff]
    %v186 = vld [vmem:[#allocation7 + $0x10] sm:$0xff]
    %v187 = vld [vmem:[#allocation7 + $0x18] sm:$0xff]
    %v188 = vld [vmem:[%s4] sm:$0x1]
    %v190 = vlaneseq
    %v191 = vshrl.u32 %v190, 7
    %v192 = vsub.s32 0, %v191
    %v193 = vrot.slane %v188, %v192
    %vm195 = vcmask 261120
    %v197 = vsel %vm195, %v183, 0
    %199 = vmatprep.subr.mxu0 0.0
    %200 = vmatpush1.msra.mxu0 0.0
    %201 = vmatprep.subr.mxu0 0.0
    %202 = vmatpush1.msra.mxu0 0.0
    %203 = vmatprep.subr.mxu0 0.0
    %204 = vmatpush1.msra.mxu0 0.0
    %205 = vmatprep.subr.mxu0 0.0
    %206 = vmatpush1.msra.mxu0 0.0
    %207 = vmatprep.subr.mxu0 0.0
    %208 = vmatpush1.msra.mxu0 0.0
    %209 = vmatprep.subr.mxu0 0.0
    %210 = vmatpush1.msra.mxu0 0.0
    %211 = vmatprep.subr.mxu0 0.0
    %212 = vmatpush1.msra.mxu0 0.0
    %213 = vmatprep.subr.mxu0 0.0
    %214 = vmatpush1.msra.mxu0 0.0
    %215 = vmatprep.subr.mxu0 0.0
    %216 = vmatpush1.msra.mxu0 0.0
    %217 = vmatprep.subr.mxu0 0.0
    %218 = vmatpush1.msra.mxu0 0.0
    %219 = vmatprep.subr.mxu0 0.0
    %220 = vmatpush1.msra.mxu0 0.0
    %221 = vmatprep.subr.mxu0 0.0
    %222 = vmatpush1.msra.mxu0 0.0
    %223 = vmatprep.subr.mxu0 0.0
    %224 = vmatpush1.msra.mxu0 %v187
    %225 = vmatprep.subr.mxu0 0.0
    %226 = vmatpush1.msra.mxu0 %v186
    %227 = vmatprep.subr.mxu0 0.0
    %228 = vmatpush1.msra.mxu0 %v185
    %229 = vmatprep.subr.mxu0 0.0
    %230 = vmatpush1.msra.mxu0 %v184
    %231 = vmatprep.subr.mxu0 0.0
    %232 = vmatpush2.msra.mxu0 0.0
    %233 = vmatprep.subr.mxu0 0.0
    %234 = vmatpush2.msra.mxu0 0.0
    %235 = vmatprep.subr.mxu0 0.0
    %236 = vmatpush2.msra.mxu0 0.0
    %237 = vmatprep.subr.mxu0 0.0
    %238 = vmatpush2.msra.mxu0 0.0
    %239 = vmatprep.subr.mxu0 0.0
    %240 = vmatpush2.msra.mxu0 0.0
    %241 = vmatprep.subr.mxu0 0.0
    %242 = vmatpush2.msra.mxu0 0.0
    %243 = vmatprep.subr.mxu0 0.0
    %244 = vmatpush2.msra.mxu0 0.0
    %245 = vmatprep.subr.mxu0 0.0
    %246 = vmatpush2.msra.mxu0 0.0
    %247 = vmatprep.subr.mxu0 0.0
    %248 = vmatpush2.msra.mxu0 0.0
    %249 = vmatprep.subr.mxu0 0.0
    %250 = vmatpush2.msra.mxu0 0.0
    %251 = vmatprep.subr.mxu0 0.0
    %252 = vmatpush2.msra.mxu0 0.0
    %253 = vmatprep.subr.mxu0 0.0
    %254 = vmatpush2.msra.mxu0 0.0
    %255 = vmatprep.subr.mxu0 0.0
    %256 = vmatpush2.msra.mxu0 0.0
    %257 = vmatprep.subr.mxu0 0.0
    %258 = vmatpush2.msra.mxu0 0.0
    %259 = vmatprep.subr.mxu0 0.0
    %260 = vmatpush2.msra.mxu0 0.0
    %261 = vmatprep.subr.mxu0 0.0
    %262 = vmatpush2.msra.mxu0 0.0
    %263 = vmatprep.mubr.f32.mxu0 0.0
    %264 = vmatmul.mubr.f32.gmra.mxu0 %v197
    %v265 = vpop.f32.mrf.mxu0
    %v266 = vadd.f32 %v193, %v265
    %v267 = vpop.f32.mrf.mxu0
    %268 = vdwg.mxu0
    %v269 = vtanh.pop %v266
    %v270 = vld [vmem:[#allocation8] sm:$0xff]
    %v271 = vld [vmem:[#allocation8 + $0x8] sm:$0xff]
    %v272 = vld [vmem:[#allocation8 + $0x10] sm:$0xff]
    %v273 = vld [vmem:[#allocation8 + $0x18] sm:$0xff]
    %v274 = vld [vmem:[%s6] sm:$0x1]
    %v276 = vlaneseq
    %v277 = vshrl.u32 %v276, 7
    %v278 = vsub.s32 0, %v277
    %v279 = vrot.slane %v274, %v278
    %v282 = vsel %vm195, %v269, 0
    %284 = vmatprep.subr.mxu0 0.0
    %285 = vmatpush1.msra.mxu0 0.0
    %286 = vmatprep.subr.mxu0 0.0
    %287 = vmatpush1.msra.mxu0 0.0
    %288 = vmatprep.subr.mxu0 0.0
    %289 = vmatpush1.msra.mxu0 0.0
    %290 = vmatprep.subr.mxu0 0.0
    %291 = vmatpush1.msra.mxu0 0.0
    %292 = vmatprep.subr.mxu0 0.0
    %293 = vmatpush1.msra.mxu0 0.0
    %294 = vmatprep.subr.mxu0 0.0
    %295 = vmatpush1.msra.mxu0 0.0
    %296 = vmatprep.subr.mxu0 0.0
    %297 = vmatpush1.msra.mxu0 0.0
    %298 = vmatprep.subr.mxu0 0.0
    %299 = vmatpush1.msra.mxu0 0.0
    %300 = vmatprep.subr.mxu0 0.0
    %301 = vmatpush1.msra.mxu0 0.0
    %302 = vmatprep.subr.mxu0 0.0
    %303 = vmatpush1.msra.mxu0 0.0
    %304 = vmatprep.subr.mxu0 0.0
    %305 = vmatpush1.msra.mxu0 0.0
    %306 = vmatprep.subr.mxu0 0.0
    %307 = vmatpush1.msra.mxu0 0.0
    %308 = vmatprep.subr.mxu0 0.0
    %309 = vmatpush1.msra.mxu0 %v273
    %310 = vmatprep.subr.mxu0 0.0
    %311 = vmatpush1.msra.mxu0 %v272
    %312 = vmatprep.subr.mxu0 0.0
    %313 = vmatpush1.msra.mxu0 %v271
    %314 = vmatprep.subr.mxu0 0.0
    %315 = vmatpush1.msra.mxu0 %v270
    %316 = vmatprep.subr.mxu0 0.0
    %317 = vmatpush2.msra.mxu0 0.0
    %318 = vmatprep.subr.mxu0 0.0
    %319 = vmatpush2.msra.mxu0 0.0
    %320 = vmatprep.subr.mxu0 0.0
    %321 = vmatpush2.msra.mxu0 0.0
    %322 = vmatprep.subr.mxu0 0.0
    %323 = vmatpush2.msra.mxu0 0.0
    %324 = vmatprep.subr.mxu0 0.0
    %325 = vmatpush2.msra.mxu0 0.0
    %326 = vmatprep.subr.mxu0 0.0
    %327 = vmatpush2.msra.mxu0 0.0
    %328 = vmatprep.subr.mxu0 0.0
    %329 = vmatpush2.msra.mxu0 0.0
    %330 = vmatprep.subr.mxu0 0.0
    %331 = vmatpush2.msra.mxu0 0.0
    %332 = vmatprep.subr.mxu0 0.0
    %333 = vmatpush2.msra.mxu0 0.0
    %334 = vmatprep.subr.mxu0 0.0
    %335 = vmatpush2.msra.mxu0 0.0
    %336 = vmatprep.subr.mxu0 0.0
    %337 = vmatpush2.msra.mxu0 0.0
    %338 = vmatprep.subr.mxu0 0.0
    %339 = vmatpush2.msra.mxu0 0.0
    %340 = vmatprep.subr.mxu0 0.0
    %341 = vmatpush2.msra.mxu0 0.0
    %342 = vmatprep.subr.mxu0 0.0
    %343 = vmatpush2.msra.mxu0 0.0
    %344 = vmatprep.subr.mxu0 0.0
    %345 = vmatpush2.msra.mxu0 0.0
    %346 = vmatprep.subr.mxu0 0.0
    %347 = vmatpush2.msra.mxu0 0.0
    %348 = vmatprep.mubr.f32.mxu0 0.0
    %349 = vmatmul.mubr.f32.gmra.mxu0 %v282
    %v350 = vpop.f32.mrf.mxu0
    %v351 = vadd.f32 %v279, %v350
    %v352 = vpop.f32.mrf.mxu0
    %353 = vdwg.mxu0
    %v354 = vtanh.pop %v351
    %v355 = vld [vmem:[#allocation10] sm:$0xff]
    %v356 = vld [vmem:[#allocation10 + $0x8] sm:$0xff]
    %v357 = vld [vmem:[#allocation10 + $0x10] sm:$0xff]
    %v358 = vld [vmem:[#allocation10 + $0x18] sm:$0xff]
    %v359 = vld [vmem:[%s8] sm:$0x1]
    %v361 = vlaneseq
    %v362 = vshrl.u32 %v361, 7
    %v363 = vsub.s32 0, %v362
    %v364 = vrot.slane %v359, %v363
    %v367 = vsel %vm195, %v354, 0
    %369 = vmatprep.subr.mxu0 0.0
    %370 = vmatpush1.msra.mxu0 0.0
    %371 = vmatprep.subr.mxu0 0.0
    %372 = vmatpush1.msra.mxu0 0.0
    %373 = vmatprep.subr.mxu0 0.0
    %374 = vmatpush1.msra.mxu0 0.0
    %375 = vmatprep.subr.mxu0 0.0
    %376 = vmatpush1.msra.mxu0 0.0
    %377 = vmatprep.subr.mxu0 0.0
    %378 = vmatpush1.msra.mxu0 0.0
    %379 = vmatprep.subr.mxu0 0.0
    %380 = vmatpush1.msra.mxu0 0.0
    %381 = vmatprep.subr.mxu0 0.0
    %382 = vmatpush1.msra.mxu0 0.0
    %383 = vmatprep.subr.mxu0 0.0
    %384 = vmatpush1.msra.mxu0 0.0
    %385 = vmatprep.subr.mxu0 0.0
    %386 = vmatpush1.msra.mxu0 0.0
    %387 = vmatprep.subr.mxu0 0.0
    %388 = vmatpush1.msra.mxu0 0.0
    %389 = vmatprep.subr.mxu0 0.0
    %390 = vmatpush1.msra.mxu0 0.0
    %391 = vmatprep.subr.mxu0 0.0
    %392 = vmatpush1.msra.mxu0 0.0
    %393 = vmatprep.subr.mxu0 0.0
    %394 = vmatpush1.msra.mxu0 %v358
    %395 = vmatprep.subr.mxu0 0.0
    %396 = vmatpush1.msra.mxu0 %v357
    %397 = vmatprep.subr.mxu0 0.0
    %398 = vmatpush1.msra.mxu0 %v356
    %399 = vmatprep.subr.mxu0 0.0
    %400 = vmatpush1.msra.mxu0 %v355
    %401 = vmatprep.subr.mxu0 0.0
    %402 = vmatpush2.msra.mxu0 0.0
    %403 = vmatprep.subr.mxu0 0.0
    %404 = vmatpush2.msra.mxu0 0.0
    %405 = vmatprep.subr.mxu0 0.0
    %406 = vmatpush2.msra.mxu0 0.0
    %407 = vmatprep.subr.mxu0 0.0
    %408 = vmatpush2.msra.mxu0 0.0
    %409 = vmatprep.subr.mxu0 0.0
    %410 = vmatpush2.msra.mxu0 0.0
    %411 = vmatprep.subr.mxu0 0.0
    %412 = vmatpush2.msra.mxu0 0.0
    %413 = vmatprep.subr.mxu0 0.0
    %414 = vmatpush2.msra.mxu0 0.0
    %415 = vmatprep.subr.mxu0 0.0
    %416 = vmatpush2.msra.mxu0 0.0
    %417 = vmatprep.subr.mxu0 0.0
    %418 = vmatpush2.msra.mxu0 0.0
    %419 = vmatprep.subr.mxu0 0.0
    %420 = vmatpush2.msra.mxu0 0.0
    %421 = vmatprep.subr.mxu0 0.0
    %422 = vmatpush2.msra.mxu0 0.0
    %423 = vmatprep.subr.mxu0 0.0
    %424 = vmatpush2.msra.mxu0 0.0
    %425 = vmatprep.subr.mxu0 0.0
    %426 = vmatpush2.msra.mxu0 0.0
    %427 = vmatprep.subr.mxu0 0.0
    %428 = vmatpush2.msra.mxu0 0.0
    %429 = vmatprep.subr.mxu0 0.0
    %430 = vmatpush2.msra.mxu0 0.0
    %431 = vmatprep.subr.mxu0 0.0
    %432 = vmatpush2.msra.mxu0 0.0
    %433 = vmatprep.mubr.f32.mxu0 0.0
    %434 = vmatmul.mubr.f32.gmra.mxu0 %v367
    %v435 = vpop.f32.mrf.mxu0
    %v436 = vadd.f32 %v364, %v435
    %v437 = vpop.f32.mrf.mxu0
    %438 = vdwg.mxu0
    %439 = vst [vmem:[#allocation11] sm:$0xff] %v436
    // Predicated region
    $region58: #{tpu_custom_call.1} parent=1 // pred_check
      _
    $region59: #{tpu_custom_call.1} parent=1 // pred_check_branch
      %441 = sbr.rel (0) target = $region61
    $region60: #{tpu_custom_call.1} parent=1 // pred_region
      %s443 = ssub.s32 128, 128
      %444 = vsyncadd [#allocation4], %s443
      %s446 = sshll.u32 [#allocation11], 4
      %s447 = int_to_ptr.vmem [resolvable:$true] %s446
      %449 = dma.vmem_to_hbm [thread:$0]  %s447, 128, %s9, [#allocation4]
    $region61: #{tpu_custom_call.1} parent=1 // pred_fallthru
      _
    // Predicated region
    $region62: #{tpu_custom_call.1} parent=1 // pred_check
      _
    $region63: #{tpu_custom_call.1} parent=1 // pred_check_branch
      %451 = sbr.rel (0) target = $region65
    $region64: #{tpu_custom_call.1} parent=1 // pred_region
      %452 = dma.done [#allocation4], 128
    $region65: #{tpu_custom_call.1} parent=1 // pred_fallthru
      _
    %453 = vsyncpa [#allocation3], 1
    %454 = vsyncpa [#allocation6], 1
    %455 = vsyncpa [#allocation9], 1
    %456 = vsyncpa [#allocation4], 1

</llo_original>
